<compile_context>
chip_gen: v5e
topology: v5e:2x2
jax: 0.10.0
libtpu: 0.0.40
codegen_flags: <defaults>
</compile_context>

<pallas_src>
import jax
import jax.numpy as jnp
from jax.experimental import pallas as pl
from jax.experimental.pallas import tpu as pltpu


def _round_up(a, b):
    return (a + b - 1) // b * b


# ---------------------------------------------------------------------------
# Chip-specific tiling presets
# ---------------------------------------------------------------------------
def _chip_preset():
    """Returns (tm_max, tn_max, tk_max, vmem_cap_bytes) for the local TPU generation."""
    kind = ""
    try:
        kind = jax.devices()[0].device_kind.lower()
    except Exception:
        pass
    if "v7" in kind:
        # 64 MiB VMEM per TC: moderate tiles (~410 flop/byte > ~310 ridge), 48 MiB scoped cap.
        return 512, 1024, 1024, 48 * 1024 * 1024
    if "v6" in kind:
        # 128 MiB VMEM, ridge ~650 flop/byte: big tiles (~680 flop/byte), 96 MiB cap.
        return 1024, 1024, 2048, 96 * 1024 * 1024
    if "v5" in kind:
        # ridge ~240 flop/byte: 512/1024 tiles already compute-bound, keep DMA latency modest.
        return 512, 1024, 1024, 96 * 1024 * 1024
    # Unknown chip: conservative, v7x-safe.
    return 512, 1024, 1024, 48 * 1024 * 1024


def make_swiglu_layout(H, I, *, tn_max=None, tk_max=None):
    """Weight-layout / tiling config. Depends only on (H, I) and the chip preset, NOT on batch,
    so the packed weights below can be built once and reused for every forward call."""
    tm_max, tn_d, tk_d, vmem_cap = _chip_preset()
    tn = min(tn_max or tn_d, _round_up(I, 128))
    tk = min(tk_max or tk_d, _round_up(H, 128))
    H_pad = _round_up(_round_up(H, 128), tk)
    I_pad = _round_up(I, tn)
    return dict(H=H, I=I, tn=tn, tk=tk, H_pad=H_pad, I_pad=I_pad,
                tm_max=tm_max, vmem_cap=vmem_cap)


# ---------------------------------------------------------------------------
# One-time weight packing (weight-load time -- NOT per forward call)
# ---------------------------------------------------------------------------
def pack_swiglu_weights(w_x, w_g, b_x, b_g, layout, *, compute_dtype=jnp.bfloat16):
    """Block-interleave Wx/Wg into a single (H_pad, 2*I_pad) slab so each grid step performs one
    (tm,tk)x(tk,2tn) MXU matmul whose first tn lanes are the 'x' half and the next tn the gate.
    Call once per weight set and cache the result; the hot path never touches the raw weights."""
    H, I = layout["H"], layout["I"]
    H_pad, I_pad, tn = layout["H_pad"], layout["I_pad"], layout["tn"]
    nI = I_pad // tn

    def pad_w(w):
        return jnp.pad(w, ((0, H_pad - H), (0, I_pad - I)))

    w_cat = jnp.stack([pad_w(w_x).reshape(H_pad, nI, tn),
                       pad_w(w_g).reshape(H_pad, nI, tn)], axis=2)
    w_cat = w_cat.reshape(H_pad, 2 * I_pad).astype(compute_dtype)

    def pad_b(b):
        return jnp.pad(b, (0, I_pad - I)).astype(jnp.float32)

    b_cat = jnp.stack([pad_b(b_x).reshape(nI, tn),
                       pad_b(b_g).reshape(nI, tn)], axis=1).reshape(1, 2 * I_pad)
    return jax.device_put(w_cat), jax.device_put(b_cat)


# ---------------------------------------------------------------------------
# Kernel
# ---------------------------------------------------------------------------
def swiglu_kernel(x_ref, w_ref, b_ref, o_ref, acc_ref):
    k = pl.program_id(2)

    @pl.when(k == 0)
    def _init():
        acc_ref[...] = jnp.zeros_like(acc_ref)

    # One fused MXU matmul for both halves: (tm, tk) x (tk, 2*tn) -> (tm, 2*tn), f32 accumulate.
    acc_ref[...] += jnp.dot(x_ref[...], w_ref[...],
                            preferred_element_type=jnp.float32)

    @pl.when(k == pl.num_programs(2) - 1)
    def _finalize():
        tn = o_ref.shape[-1]
        # Per-half bias add directly off the accumulator slices (lane-aligned, no (tm,2tn) f32 temp).
        h = acc_ref[:, :tn] + b_ref[:, :tn]      # "x" half
        g = acc_ref[:, tn:] + b_ref[:, tn:]      # "gate" half
        o_ref[...] = (h * jax.nn.sigmoid(g)).astype(o_ref.dtype)


def _pick_tm(M, tm_max):
    """Row-tile choice: bf16 sublane multiple of 16; shrink below tm_max only if it saves whole
    vreg rows of padding on ragged M (keeps arithmetic intensity as high as possible)."""
    M16 = _round_up(M, 16)
    if M16 <= tm_max:
        return M16                       # single row-tile, minimal padding
    best, best_waste = tm_max, _round_up(M16, tm_max) - M16
    cand = tm_max - 128
    while cand >= max(128, tm_max // 4):
        waste = _round_up(M16, cand) - M16
        if waste + 128 <= best_waste:    # only shrink if it saves >= one 128-row block of waste
            best, best_waste = cand, waste
        cand -= 128
    return best


# ---------------------------------------------------------------------------
# Hot path (weights already packed)
# ---------------------------------------------------------------------------
def swiglu_pallas(x, w_cat, b_cat, layout, *, out_dtype=None,
                  compute_dtype=jnp.bfloat16):
    """x: (..., H). w_cat/b_cat must come from pack_swiglu_weights(layout).
    out_dtype=jnp.bfloat16 halves output HBM writeback when the consumer tolerates bf16."""
    *lead, H = x.shape
    assert H == layout["H"]
    I = layout["I"]
    tn, tk = layout["tn"], layout["tk"]
    H_pad, I_pad = layout["H_pad"], layout["I_pad"]
    tm_max, vmem_cap = layout["tm_max"], layout["vmem_cap"]
    out_dtype = out_dtype if out_dtype is not None else x.dtype

    M = 1
    for d in lead:
        M *= d
    tm = _pick_tm(M, tm_max)
    M_pad = _round_up(_round_up(M, 16), tm)

    x2d = x.reshape(M, H)
    x2d = jnp.pad(x2d, ((0, M_pad - M), (0, H_pad - H))).astype(compute_dtype)

    gm, gn, gk = M_pad // tm, I_pad // tn, H_pad // tk
    grid = (gm, gn, gk)

    cb = jnp.dtype(compute_dtype).itemsize
    ob = jnp.dtype(out_dtype).itemsize

    # Per-step VMEM footprint: double-buffered x / bias / out, f32 accumulator, weight slab at
    # its chosen pipeline depth.  (No extra x2 on top -- depths are already explicit.)
    w_step = tk * 2 * tn * cb
    base_bytes = (2 * tm * tk * cb          # x tile, double-buffered
                  + 2 * 2 * tn * 4          # bias slab, double-buffered
                  + 2 * tm * tn * ob        # output tile, double-buffered
                  + tm * 2 * tn * 4)        # f32 accumulator scratch
    # Deepen the weight-slab pipeline when there are >=3 K-steps and VMEM allows (hides the
    # largest per-step DMA on DMA-latency-bound shapes).
    w_depth = 3 if (gk >= 3 and base_bytes + 3 * w_step + (8 << 20) <= vmem_cap) else 2
    step_bytes = base_bytes + w_depth * w_step
    vmem_limit = int(min(max(step_bytes + (8 << 20), 32 << 20), vmem_cap))

    if w_depth == 2:
        w_spec = pl.BlockSpec((tk, 2 * tn), lambda i, j, k: (k, j))
    else:
        w_spec = pl.BlockSpec((tk, 2 * tn), lambda i, j, k: (k, j),
                              pipeline_mode=pl.Buffered(w_depth))

    # Advisory cost estimate reflecting actual re-streaming (x read gn times, W read gm times).
    cost = pl.CostEstimate(
        flops=4 * M_pad * I_pad * H_pad,
        transcendentals=M_pad * I_pad,
        bytes_accessed=(gn * M_pad * H_pad * cb
                        + gm * H_pad * 2 * I_pad * cb
                        + 2 * I_pad * 4
                        + M_pad * I_pad * ob),
    )

    out2d = pl.pallas_call(
        swiglu_kernel,
        out_shape=jax.ShapeDtypeStruct((M_pad, I_pad), out_dtype),
        grid_spec=pltpu.PrefetchScalarGridSpec(
            num_scalar_prefetch=0,
            grid=grid,
            in_specs=[
                pl.BlockSpec((tm, tk), lambda i, j, k: (i, k)),      # x tile
                w_spec,                                              # [Wx_j | Wg_j] slab
                pl.BlockSpec((1, 2 * tn), lambda i, j, k: (0, j)),   # [bx_j | bg_j]
            ],
            out_specs=pl.BlockSpec((tm, tn), lambda i, j, k: (i, j)),
            scratch_shapes=[pltpu.VMEM((tm, 2 * tn), jnp.float32)],
        ),
        compiler_params=pltpu.CompilerParams(
            dimension_semantics=("parallel", "parallel", "arbitrary"),
            vmem_limit_bytes=vmem_limit,
        ),
        cost_estimate=cost,
    )(x2d, w_cat, b_cat)

    return out2d[:M, :I].reshape(*lead, I)


if __name__ == "__main__":
    # Module config: hidden_dim=32 -> inner_dim = 4*32 = 128
    B, S, H = 2, 8, 32
    I = 4 * H

    key = jax.random.PRNGKey(0)
    kx, kw, kb = jax.random.split(key, 3)

    x = jax.random.normal(kx, (B, S, H), dtype=jnp.float32)

    # nn.Linear(hidden, 2*inner): weight [2*I, H], bias [2*I]  (torch-like uniform init)
    bound = 1.0 / (H ** 0.5)
    w_full = jax.random.uniform(kw, (2 * I, H), minval=-bound, maxval=bound,
                                dtype=jnp.float32)
    b_full = jax.random.uniform(kb, (2 * I,), minval=-bound, maxval=bound,
                                dtype=jnp.float32)

    # chunk(2, dim=-1) on the projection output == split weight rows into halves
    w_x = w_full[:I, :].T          # (H, I) -> "x" half
    w_g = w_full[I:, :].T          # (H, I) -> "gate" half
    b_x = b_full[:I]
    b_g = b_full[I:]

    # ---- weight-load time: build layout + pack weights ONCE (not per forward call) ----
    layout = make_swiglu_layout(H, I)
    w_cat, b_cat = pack_swiglu_weights(w_x, w_g, b_x, b_g, layout)

    # ---- forward (hot path touches only x and the pre-packed slabs) ----
    out = swiglu_pallas(x, w_cat, b_cat, layout)
    out = jax.block_until_ready(out)

    # Reference with matching bf16 matmul inputs / f32 accumulation (same numerics as kernel).
    x2d_b = x.reshape(-1, H).astype(jnp.bfloat16)
    w_t_b = w_full.T.astype(jnp.bfloat16)
    proj = jnp.dot(x2d_b, w_t_b, preferred_element_type=jnp.float32) + b_full
    ref_h, ref_g = proj[:, :I], proj[:, I:]
    ref = (ref_h * jax.nn.sigmoid(ref_g)).astype(x.dtype).reshape(B, S, I)
    assert jnp.allclose(out, ref, atol=1e-4, rtol=1e-4), "mismatch vs bf16 reference"

    # Loose sanity check against pure-f32 math (difference is bf16 input rounding only).
    ref32 = x.reshape(-1, H) @ w_full.T + b_full
    ref32 = (ref32[:, :I] * jax.nn.sigmoid(ref32[:, I:])).reshape(B, S, I)
    assert jnp.allclose(out, ref32, atol=5e-2, rtol=5e-2), "mismatch vs f32 reference"

    # bf16-output path (halved writeback); check loosely against the bf16-cast reference.
    out_bf16 = jax.block_until_ready(
        swiglu_pallas(x, w_cat, b_cat, layout, out_dtype=jnp.bfloat16))
    assert jnp.allclose(out_bf16.astype(jnp.float32), ref, atol=2e-2, rtol=2e-2), \
        "mismatch vs reference (bf16 output)"

    print("KERNEL_OK")
</pallas_src>

<mosaic_0001>
module attributes {stable_mosaic.version = 11 : i64} {
  func.func @swiglu_kernel(%arg0: i32, %arg1: i32, %arg2: i32, %arg3: memref<16x128xbf16, #tpu.memory_space<vmem>>, %arg4: memref<128x256xbf16, #tpu.memory_space<vmem>>, %arg5: memref<1x256xf32, #tpu.memory_space<vmem>>, %arg6: memref<16x128xf32, #tpu.memory_space<vmem>>, %arg7: memref<16x256xf32, #tpu.memory_space<vmem>>) attributes {dimension_semantics = [#tpu.dimension_semantics<parallel>, #tpu.dimension_semantics<parallel>, #tpu.dimension_semantics<arbitrary>], iteration_bounds = array<i64: 1, 1, 1>, scalar_prefetch = 0 : i64, scratch_operands = 1 : i64, tpu.core_type = #tpu.core_type<tc>, window_params = [{transform_indices = @transform_0, window_bounds = array<i64: 16, 128>}, {transform_indices = @transform_1, window_bounds = array<i64: 128, 256>}, {transform_indices = @transform_2, window_bounds = array<i64: 1, 256>}, {transform_indices = @transform_3, window_bounds = array<i64: 16, 128>}]} {
    %c0_i32 = arith.constant 0 : i32
    %0 = arith.cmpi eq, %arg2, %c0_i32 : i32
    %1 = arith.extui %0 : i1 to i32
    %c0_i32_0 = arith.constant 0 : i32
    %2 = arith.cmpi ne, %1, %c0_i32_0 : i32
    scf.if %2 {
      %cst_10 = arith.constant 0.000000e+00 : f32
      %12 = vector.broadcast %cst_10 : f32 to vector<16x256xf32>
      %c0_11 = arith.constant 0 : index
      %c0_12 = arith.constant 0 : index
      %13 = vector.load %arg7[%c0_11, %c0_12] : memref<16x256xf32, #tpu.memory_space<vmem>>, vector<16x256xf32>
      tpu.vector_store %arg7[%c0_11, %c0_12], %12 {strides = array<i32>} : memref<16x256xf32, #tpu.memory_space<vmem>>, vector<16x256xf32>,
    } else {
    }
    %c0 = arith.constant 0 : index
    %c0_1 = arith.constant 0 : index
    %3 = vector.load %arg7[%c0, %c0_1] : memref<16x256xf32, #tpu.memory_space<vmem>>, vector<16x256xf32>
    %c0_2 = arith.constant 0 : index
    %c0_3 = arith.constant 0 : index
    %4 = vector.load %arg3[%c0_2, %c0_3] : memref<16x128xbf16, #tpu.memory_space<vmem>>, vector<16x128xbf16>
    %c0_4 = arith.constant 0 : index
    %c0_5 = arith.constant 0 : index
    %5 = vector.load %arg4[%c0_4, %c0_5] : memref<128x256xbf16, #tpu.memory_space<vmem>>, vector<128x256xbf16>
    %cst = arith.constant dense<0.000000e+00> : vector<16x256xf32>
    %6 = tpu.matmul %4, %5, %cst {dimension_numbers = #tpu.dot_dimension_numbers<[1], [0], [0], [1], [0, 0, 1, 1], [], []>} : vector<16x128xbf16>, vector<128x256xbf16>, vector<16x256xf32> -> vector<16x256xf32>
    %7 = arith.addf %3, %6 : vector<16x256xf32>
    %c0_6 = arith.constant 0 : index
    %c0_7 = arith.constant 0 : index
    %8 = vector.load %arg7[%c0_6, %c0_7] : memref<16x256xf32, #tpu.memory_space<vmem>>, vector<16x256xf32>
    tpu.vector_store %arg7[%c0_6, %c0_7], %7 {strides = array<i32>} : memref<16x256xf32, #tpu.memory_space<vmem>>, vector<16x256xf32>,
    %c0_i32_8 = arith.constant 0 : i32
    %9 = arith.cmpi eq, %arg2, %c0_i32_8 : i32
    %10 = arith.extui %9 : i1 to i32
    %c0_i32_9 = arith.constant 0 : i32
    %11 = arith.cmpi ne, %10, %c0_i32_9 : i32
    scf.if %11 {
      %c0_10 = arith.constant 0 : index
      %c0_11 = arith.constant 0 : index
      %12 = vector.load %arg7[%c0_10, %c0_11] : memref<16x256xf32, #tpu.memory_space<vmem>>, vector<16x128xf32>
      %c0_12 = arith.constant 0 : index
      %c0_13 = arith.constant 0 : index
      %13 = vector.load %arg5[%c0_12, %c0_13] : memref<1x256xf32, #tpu.memory_space<vmem>>, vector<1x128xf32>
      %14 = vector.broadcast %13 : vector<1x128xf32> to vector<16x128xf32>
      %15 = arith.addf %12, %14 : vector<16x128xf32>
      %c0_14 = arith.constant 0 : index
      %c128 = arith.constant 128 : index
      %16 = vector.load %arg7[%c0_14, %c128] : memref<16x256xf32, #tpu.memory_space<vmem>>, vector<16x128xf32>
      %c0_15 = arith.constant 0 : index
      %c128_16 = arith.constant 128 : index
      %17 = vector.load %arg5[%c0_15, %c128_16] : memref<1x256xf32, #tpu.memory_space<vmem>>, vector<1x128xf32>
      %18 = vector.broadcast %17 : vector<1x128xf32> to vector<16x128xf32>
      %19 = arith.addf %16, %18 : vector<16x128xf32>
      %20 = arith.negf %19 : vector<16x128xf32>
      %21 = math.exp %20 : vector<16x128xf32>
      %cst_17 = arith.constant 1.000000e+00 : f32
      %22 = vector.broadcast %cst_17 : f32 to vector<16x128xf32>
      %23 = arith.addf %22, %21 : vector<16x128xf32>
      %24 = arith.divf %22, %23 : vector<16x128xf32>
      %25 = arith.mulf %15, %24 : vector<16x128xf32>
      %c0_18 = arith.constant 0 : index
      %c0_19 = arith.constant 0 : index
      %26 = vector.load %arg6[%c0_18, %c0_19] : memref<16x128xf32, #tpu.memory_space<vmem>>, vector<16x128xf32>
      tpu.vector_store %arg6[%c0_18, %c0_19], %25 {strides = array<i32>} : memref<16x128xf32, #tpu.memory_space<vmem>>, vector<16x128xf32>,
    } else {
    }
    return
  }
  func.func @transform_0(%arg0: i32, %arg1: i32, %arg2: i32) -> (i32, i32) {
    %c0_i32 = arith.constant 0 : i32
    return %arg0, %arg2 : i32, i32
  }
  func.func @transform_1(%arg0: i32, %arg1: i32, %arg2: i32) -> (i32, i32) {
    %c0_i32 = arith.constant 0 : i32
    return %arg2, %arg1 : i32, i32
  }
  func.func @transform_2(%arg0: i32, %arg1: i32, %arg2: i32) -> (i32, i32) {
    %c0_i32 = arith.constant 0 : i32
    %c0_i32_0 = arith.constant 0 : i32
    return %c0_i32, %arg1 : i32, i32
  }
  func.func @transform_3(%arg0: i32, %arg1: i32, %arg2: i32) -> (i32, i32) {
    %c0_i32 = arith.constant 0 : i32
    return %arg0, %arg1 : i32, i32
  }
}

</mosaic_0001>

<llo_original>
// kernel: tpu_custom_call.1
$region0: #{tpu_custom_call.1}
  #allocation0 [shape = 'u32[]', space=smem, size = 0x4, offset = 0x4, fixed_abs, tag = 'smem constant byte address 0x4 - core index']
  #allocation1 [shape = 'u32[72,128]{1,0:T(1,128)}', space=vmem, size = 0x9000, scoped, tag = 'internal scratch']
  #allocation2 [shape = 'f32[16,256]{1,0:T(8,128)}', space=vmem, size = 0x4000, scoped, tag = 'scratch operand']
  %s0 = inlined_call_operand.hbm [shape: bf16[16,128], index: 0, kind: input, shape index: {}]
  %s1 = inlined_call_operand.hbm [shape: bf16[128,256], index: 1, kind: input, shape index: {}]
  %s2 = inlined_call_operand.hbm [shape: f32[1,256], index: 2, kind: input, shape index: {}]
  %s3 = inlined_call_operand.hbm [shape: f32[16,128], index: 3, kind: output, shape index: {}]
  %s4 = sld [smem:[#allocation0]]
  $region42: #{tpu_custom_call.1} parent=0
    _
  %s6 = ssub.s32 1, %s4
  %s7 = scalar_select 0, %s6, %s4
  $region1: #{tpu_custom_call.1} parent=0
    #allocation3 [shape = 'u8[4096]{0}', space=vmem, size = 0x1000, scoped, tag = 'input window, operand 0, single buffered']
    #allocation4 [shape = 's32[1]{0}', space=sflag, size = 0x4, scoped, tag = 'scoped memory for tpu_custom_call.1']
    #allocation5 [shape = 's32[1]{0}', space=sflag, size = 0x4, scoped, tag = 'scoped memory for tpu_custom_call.1']
    #allocation6 [shape = 'u8[65536]{0}', space=vmem, size = 0x10000, scoped, tag = 'input window, operand 1, single buffered']
    #allocation7 [shape = 's32[1]{0}', space=sflag, size = 0x4, scoped, tag = 'scoped memory for tpu_custom_call.1']
    #allocation8 [shape = 'u8[1024]{0}', space=vmem, size = 0x400, scoped, tag = 'input window, operand 2, single buffered']
    #allocation9 [shape = 'u8[8192]{0}', space=vmem, size = 0x2000, scoped, tag = 'output window, operand 0, single buffered']
    %8 = vsyncpa [#allocation4], 0
    %9 = vsyncpa [#allocation7], 0
    %10 = vsyncpa [#allocation5], 0
    // Predicated region
    $region2: #{tpu_custom_call.1} parent=1 // pred_check
      _
    $region3: #{tpu_custom_call.1} parent=1 // pred_check_branch
      %12 = sbr.rel (0) target = $region5
    $region4: #{tpu_custom_call.1} parent=1 // pred_region
      %14 = vsyncadd [#allocation4], 0
      %s15 = sshll.u32 %s0, 4
      %s16 = int_to_ptr.hbm [resolvable:$true] %s15
      %s17 = sshll.u32 [#allocation3], 4
      %s18 = int_to_ptr.vmem [resolvable:$true] %s17
      %23 = dma.hbm_to_vmem [thread:$0]  %s16, 128, %s18, [#allocation4], 64, 64, 4
    $region5: #{tpu_custom_call.1} parent=1 // pred_fallthru
      _
    // Predicated region
    $region6: #{tpu_custom_call.1} parent=1 // pred_check
      _
    $region7: #{tpu_custom_call.1} parent=1 // pred_check_branch
      %25 = sbr.rel (0) target = $region9
    $region8: #{tpu_custom_call.1} parent=1 // pred_region
      %27 = vsyncadd [#allocation7], 0
      %s28 = sshll.u32 %s1, 4
      %s29 = int_to_ptr.hbm [resolvable:$true] %s28
      %s30 = sshll.u32 [#allocation6], 4
      %s31 = int_to_ptr.vmem [resolvable:$true] %s30
      %36 = dma.hbm_to_vmem [thread:$0]  %s29, 2048, %s31, [#allocation7], 128, 128, 8
    $region9: #{tpu_custom_call.1} parent=1 // pred_fallthru
      _
    // Predicated region
    $region10: #{tpu_custom_call.1} parent=1 // pred_check
      _
    $region11: #{tpu_custom_call.1} parent=1 // pred_check_branch
      %38 = sbr.rel (0) target = $region13
    $region12: #{tpu_custom_call.1} parent=1 // pred_region
      %40 = vsyncadd [#allocation7], 0
      %s42 = sshll.u32 %s2, 4
      %s43 = int_to_ptr.hbm [resolvable:$true] %s42
      %s44 = sshll.u32 [#allocation8], 4
      %s45 = int_to_ptr.vmem [resolvable:$true] %s44
      %47 = dma.hbm_to_vmem [thread:$0]  %s43, 32, %s45, [#allocation7]
    $region13: #{tpu_custom_call.1} parent=1 // pred_fallthru
      _
    // Predicated region
    $region14: #{tpu_custom_call.1} parent=1 // pred_check
      _
    $region15: #{tpu_custom_call.1} parent=1 // pred_check_branch
      %49 = sbr.rel (0) target = $region17
    $region16: #{tpu_custom_call.1} parent=1 // pred_region
      %51 = dma.done [#allocation4], 128
    $region17: #{tpu_custom_call.1} parent=1 // pred_fallthru
      _
    // Predicated region
    $region18: #{tpu_custom_call.1} parent=1 // pred_check
      _
    $region19: #{tpu_custom_call.1} parent=1 // pred_check_branch
      %53 = sbr.rel (0) target = $region21
    $region20: #{tpu_custom_call.1} parent=1 // pred_region
      %55 = dma.done [#allocation7], 2048
    $region21: #{tpu_custom_call.1} parent=1 // pred_fallthru
      _
    // Predicated region
    $region22: #{tpu_custom_call.1} parent=1 // pred_check
      _
    $region23: #{tpu_custom_call.1} parent=1 // pred_check_branch
      %57 = sbr.rel (0) target = $region25
    $region24: #{tpu_custom_call.1} parent=1 // pred_region
      %59 = dma.done [#allocation7], 32
    $region25: #{tpu_custom_call.1} parent=1 // pred_fallthru
      _
    %p60 = scmp.eq.s32.totalorder 0, 0
    // Predicated region
    $region26: #{tpu_custom_call.1} parent=1 // pred_check
      %p61 = pneg %p60
    $region27: #{tpu_custom_call.1} parent=1 // pred_check_branch
      %63 = sbr.rel (%p61) target = $region29
    $region28: #{tpu_custom_call.1} parent=1 // pred_region
      %64 = vst [vmem:[#allocation2] sm:$0xff] 0.0
      %65 = vst [vmem:[#allocation2 + $0x8] sm:$0xff] 0.0
      %66 = vst [vmem:[#allocation2 + $0x10] sm:$0xff] 0.0
      %67 = vst [vmem:[#allocation2 + $0x18] sm:$0xff] 0.0
    $region29: #{tpu_custom_call.1} parent=1 // pred_fallthru
      _
    %v68 = vld [vmem:[#allocation2] sm:$0xff]
    %v69 = vld [vmem:[#allocation2 + $0x8] sm:$0xff]
    %v70 = vld [vmem:[#allocation2 + $0x10] sm:$0xff]
    %v71 = vld [vmem:[#allocation2 + $0x18] sm:$0xff]
    %v72 = vld [vmem:[#allocation3] sm:$0xf]
    %v73 = vld [vmem:[#allocation3 + $0x4] sm:$0xf]
    %v74 = vld [vmem:[#allocation6] sm:$0xff]
    %v75 = vld [vmem:[#allocation6 + $0x8] sm:$0xff]
    %v76 = vld [vmem:[#allocation6 + $0x10] sm:$0xff]
    %v77 = vld [vmem:[#allocation6 + $0x18] sm:$0xff]
    %v78 = vld [vmem:[#allocation6 + $0x20] sm:$0xff]
    %v79 = vld [vmem:[#allocation6 + $0x28] sm:$0xff]
    %v80 = vld [vmem:[#allocation6 + $0x30] sm:$0xff]
    %v81 = vld [vmem:[#allocation6 + $0x38] sm:$0xff]
    %v82 = vld [vmem:[#allocation6 + $0x40] sm:$0xff]
    %v83 = vld [vmem:[#allocation6 + $0x48] sm:$0xff]
    %v84 = vld [vmem:[#allocation6 + $0x50] sm:$0xff]
    %v85 = vld [vmem:[#allocation6 + $0x58] sm:$0xff]
    %v86 = vld [vmem:[#allocation6 + $0x60] sm:$0xff]
    %v87 = vld [vmem:[#allocation6 + $0x68] sm:$0xff]
    %v88 = vld [vmem:[#allocation6 + $0x70] sm:$0xff]
    %v89 = vld [vmem:[#allocation6 + $0x78] sm:$0xff]
    %v92 = vunpack.c.l.b16 %v72
    %v93 = vunpack.c.l.b16 %v73
    %v94 = vpack.c.b16 %v93, %v92
    %v112 = vunpack.c.l.b16 %v74
    %v113 = vunpack.c.h.b16 %v74
    %v114 = vunpack.c.l.b16 %v75
    %v115 = vunpack.c.h.b16 %v75
    %v116 = vunpack.c.l.b16 %v76
    %v117 = vunpack.c.h.b16 %v76
    %v118 = vunpack.c.l.b16 %v77
    %v119 = vunpack.c.h.b16 %v77
    %v120 = vunpack.c.l.b16 %v78
    %v121 = vunpack.c.h.b16 %v78
    %v122 = vunpack.c.l.b16 %v79
    %v123 = vunpack.c.h.b16 %v79
    %v124 = vunpack.c.l.b16 %v80
    %v125 = vunpack.c.h.b16 %v80
    %v126 = vunpack.c.l.b16 %v81
    %v127 = vunpack.c.h.b16 %v81
    %v128 = vunpack.c.l.b16 %v82
    %v129 = vunpack.c.h.b16 %v82
    %v130 = vunpack.c.l.b16 %v83
    %v131 = vunpack.c.h.b16 %v83
    %v132 = vunpack.c.l.b16 %v84
    %v133 = vunpack.c.h.b16 %v84
    %v134 = vunpack.c.l.b16 %v85
    %v135 = vunpack.c.h.b16 %v85
    %v136 = vunpack.c.l.b16 %v86
    %v137 = vunpack.c.h.b16 %v86
    %v138 = vunpack.c.l.b16 %v87
    %v139 = vunpack.c.h.b16 %v87
    %v140 = vunpack.c.l.b16 %v88
    %v141 = vunpack.c.h.b16 %v88
    %v142 = vunpack.c.l.b16 %v89
    %v143 = vunpack.c.h.b16 %v89
    %v144 = vpack.c.b16 %v114, %v112
    %v145 = vpack.c.b16 %v115, %v113
    %v146 = vpack.c.b16 %v118, %v116
    %v147 = vpack.c.b16 %v119, %v117
    %v148 = vpack.c.b16 %v122, %v120
    %v149 = vpack.c.b16 %v123, %v121
    %v150 = vpack.c.b16 %v126, %v124
    %v151 = vpack.c.b16 %v127, %v125
    %v152 = vpack.c.b16 %v130, %v128
    %v153 = vpack.c.b16 %v131, %v129
    %v154 = vpack.c.b16 %v134, %v132
    %v155 = vpack.c.b16 %v135, %v133
    %v156 = vpack.c.b16 %v138, %v136
    %v157 = vpack.c.b16 %v139, %v137
    %v158 = vpack.c.b16 %v142, %v140
    %v159 = vpack.c.b16 %v143, %v141
    %176 = vmatpush.bf16.msra.mxu0 %v158
    %177 = vmatpush.bf16.msra.mxu0 %v156
    %178 = vmatpush.bf16.msra.mxu0 %v154
    %179 = vmatpush.bf16.msra.mxu0 %v152
    %180 = vmatpush.bf16.msra.mxu0 %v150
    %181 = vmatpush.bf16.msra.mxu0 %v148
    %182 = vmatpush.bf16.msra.mxu0 %v146
    %183 = vmatpush.bf16.msra.mxu0 %v144
    %184 = vmatmul.bf16.gmra.mxu0 %v94
    %v185 = vpop.f32.mrf.mxu0
    %v186 = vadd.f32 0.0, %v185
    %v187 = vpop.f32.mrf.mxu0
    %v188 = vadd.f32 0.0, %v187
    %189 = vdwg.mxu0
    %190 = vmatpush.bf16.msra.mxu0 %v159
    %191 = vmatpush.bf16.msra.mxu0 %v157
    %192 = vmatpush.bf16.msra.mxu0 %v155
    %193 = vmatpush.bf16.msra.mxu0 %v153
    %194 = vmatpush.bf16.msra.mxu0 %v151
    %195 = vmatpush.bf16.msra.mxu0 %v149
    %196 = vmatpush.bf16.msra.mxu0 %v147
    %197 = vmatpush.bf16.msra.mxu0 %v145
    %198 = vmatmul.bf16.gmra.mxu0 %v94
    %v199 = vpop.f32.mrf.mxu0
    %v200 = vadd.f32 0.0, %v199
    %v201 = vpop.f32.mrf.mxu0
    %v202 = vadd.f32 0.0, %v201
    %203 = vdwg.mxu0
    %v204 = vadd.f32 %v68, %v186
    %v205 = vadd.f32 %v69, %v200
    %v206 = vadd.f32 %v70, %v188
    %v207 = vadd.f32 %v71, %v202
    %208 = vst [vmem:[#allocation2] sm:$0xff] %v204
    %209 = vst [vmem:[#allocation2 + $0x8] sm:$0xff] %v205
    %210 = vst [vmem:[#allocation2 + $0x10] sm:$0xff] %v206
    %211 = vst [vmem:[#allocation2 + $0x18] sm:$0xff] %v207
    // Predicated region
    $region30: #{tpu_custom_call.1} parent=1 // pred_check
      %p212 = pneg %p60
    $region31: #{tpu_custom_call.1} parent=1 // pred_check_branch
      %214 = sbr.rel (%p212) target = $region33
    $region32: #{tpu_custom_call.1} parent=1 // pred_region
      %v215 = vld [vmem:[#allocation2] sm:$0xff]
      %v216 = vld [vmem:[#allocation2 + $0x10] sm:$0xff]
      %v217 = vld [vmem:[#allocation8] sm:$0x1]
      %v219 = vperm.slane %v217, 0
      %v221 = vadd.f32 %v215, %v219
      %v222 = vadd.f32 %v216, %v219
      %v223 = vld [vmem:[#allocation2 + $0x8] sm:$0xff]
      %v224 = vld [vmem:[#allocation2 + $0x18] sm:$0xff]
      %v225 = vld [vmem:[#allocation8 + $0x1] sm:$0x1]
      %v227 = vperm.slane %v225, 0
      %v229 = vadd.f32 %v223, %v227
      %v230 = vadd.f32 %v224, %v227
      %v231 = vxor.u32 %v229, 2147483648
      %v232 = vxor.u32 %v230, 2147483648
      %v233 = vmul.f32 %v231, 1.442695
      %v234 = vpow.pop %v233
      %v235 = vmul.f32 %v232, 1.442695
      %v236 = vpow.pop %v235
      %v237 = vadd.f32 %v234, 1.0
      %v238 = vadd.f32 %v236, 1.0
      %v239 = vrcp.pop %v237
      %v240 = vmul.f32 %v237, %v239
      %v241 = vsub.f32 1.0, %v240
      %v242 = vmul.f32 %v239, %v241
      %v243 = vadd.f32 %v239, %v242
      %vm244 = vweird.f32 %v237
      %vm245 = vweird.f32 %v239
      %vm246 = vmor %vm244, %vm245
      %v247 = vsel %vm246, %v239, %v243
      %v248 = vand.u32 2147483647, %v237
      %vm249 = vcmp.eq.f32.partialorder %v248, 8.507059e+37
      %v250 = vand.u32 %v237, 2147483648
      %v251 = vor.u32 1.1754944e-38, %v250
      %v252 = vsel %vm249, %v251, %v247
      %v253 = vmul.f32 1.0, %v252
      %v254 = vrcp.pop %v238
      %v255 = vmul.f32 %v238, %v254
      %v256 = vsub.f32 1.0, %v255
      %v257 = vmul.f32 %v254, %v256
      %v258 = vadd.f32 %v254, %v257
      %vm259 = vweird.f32 %v238
      %vm260 = vweird.f32 %v254
      %vm261 = vmor %vm259, %vm260
      %v262 = vsel %vm261, %v254, %v258
      %v263 = vand.u32 2147483647, %v238
      %vm264 = vcmp.eq.f32.partialorder %v263, 8.507059e+37
      %v265 = vand.u32 %v238, 2147483648
      %v266 = vor.u32 1.1754944e-38, %v265
      %v267 = vsel %vm264, %v266, %v262
      %v268 = vmul.f32 1.0, %v267
      %v269 = vmul.f32 %v221, %v253
      %v270 = vmul.f32 %v222, %v268
      %271 = vst [vmem:[#allocation9] sm:$0xff] %v269
      %272 = vst [vmem:[#allocation9 + $0x8] sm:$0xff] %v270
    $region33: #{tpu_custom_call.1} parent=1 // pred_fallthru
      _
    // Predicated region
    $region34: #{tpu_custom_call.1} parent=1 // pred_check
      _
    $region35: #{tpu_custom_call.1} parent=1 // pred_check_branch
      %274 = sbr.rel (0) target = $region37
    $region36: #{tpu_custom_call.1} parent=1 // pred_region
      %276 = vsyncadd [#allocation5], 0
      %s277 = sshll.u32 [#allocation9], 4
      %s278 = int_to_ptr.vmem [resolvable:$true] %s277
      %s279 = sshll.u32 %s3, 4
      %s280 = int_to_ptr.hbm [resolvable:$true] %s279
      %285 = dma.vmem_to_hbm [thread:$0]  %s278, 256, %s280, [#allocation5], 128, 128, 8
    $region37: #{tpu_custom_call.1} parent=1 // pred_fallthru
      _
    // Predicated region
    $region38: #{tpu_custom_call.1} parent=1 // pred_check
      _
    $region39: #{tpu_custom_call.1} parent=1 // pred_check_branch
      %287 = sbr.rel (0) target = $region41
    $region40: #{tpu_custom_call.1} parent=1 // pred_region
      %289 = dma.done [#allocation5], 256
    $region41: #{tpu_custom_call.1} parent=1 // pred_fallthru
      _
    %290 = vsyncpa [#allocation4], 1
    %291 = vsyncpa [#allocation7], 1
    %292 = vsyncpa [#allocation5], 1

</llo_original>
